<compile_context>
chip_gen: v5e
topology: v5e:2x2
jax: 0.10.0
libtpu: 0.0.40
codegen_flags: <defaults>
</compile_context>

<pallas_src>
import functools

import jax
import jax.numpy as jnp
from jax.experimental import pallas as pl
from jax.experimental.pallas import tpu as pltpu

IN_PAD = 8      # input lanes: [x, y, t, 1, 0, 0, 0, 0]
HID_PAD = 128   # hidden-layer lane width (MXU native)
OUT_PAD = 8     # output lanes (layers[-1] padded to 8)
TM_MAX = 512    # max batch (points) tile size


def _round_up(v, m):
    return ((v + m - 1) // m) * m


def _mlp_kernel(n_layers, x_ref, w0_ref, *refs):
    """refs = (w1, b1, w2, b2, ..., w_{L-1}, b_{L-1}, out_ref).

    Layer 0's bias is folded into w0 (constant-1 input lane), so it has no
    separate bias ref.  Hidden layers use tanh; the last layer is linear.
    """
    out_ref = refs[-1]
    rest = refs[:-1]

    # Layer 0: (TM, IN_PAD) @ (IN_PAD, H) ; bias comes from the constant-1 lane.
    a = jnp.dot(x_ref[...], w0_ref[...], preferred_element_type=jnp.float32)

    for i in range(1, n_layers):
        a = jnp.tanh(a)                              # activation of previous layer
        w = rest[2 * (i - 1)][...]
        b = rest[2 * (i - 1) + 1][...]
        a = jnp.dot(a, w, preferred_element_type=jnp.float32) + b

    out_ref[...] = a                                 # (TM, OUT_PAD), lane-dense


def init_pinn_params(layers, key):
    """Deterministic Xavier-normal weights, zero biases (matches __init__)."""
    params = []
    for i in range(len(layers) - 1):
        key, sub = jax.random.split(key)
        fan_in, fan_out = layers[i], layers[i + 1]
        std = (2.0 / (fan_in + fan_out)) ** 0.5
        w = std * jax.random.normal(sub, (fan_in, fan_out), dtype=jnp.float32)
        b = jnp.zeros((fan_out,), dtype=jnp.float32)
        params.append((w, b))
    return params


def _pad_params(params, layers):
    """Pad weights to lane-aligned shapes; fold layer-0 bias via the 1-lane."""
    n_layers = len(layers) - 1
    padded = []
    for i, (w, b) in enumerate(params):
        in_pad = IN_PAD if i == 0 else HID_PAD
        out_pad = OUT_PAD if i == n_layers - 1 else HID_PAD
        wp = jnp.zeros((in_pad, out_pad), jnp.float32)
        wp = wp.at[: w.shape[0], : w.shape[1]].set(w)
        if i == 0:
            # Bias folded into the row hit by the constant-1 input lane.
            wp = wp.at[w.shape[0], : b.shape[0]].set(b)
            padded.append((wp, None))
        else:
            bp = jnp.zeros((1, out_pad), jnp.float32).at[0, : b.shape[0]].set(b)
            padded.append((wp, bp))
    return padded


def pinn_forward(x, y, t, params, layers, *, tm_max=TM_MAX):
    """Pallas implementation of PINN.forward(x, y, t)."""
    n = x.shape[0]
    d_in = layers[0]
    d_out = layers[-1]
    n_layers = len(layers) - 1

    # Shape sanity: this kernel assumes narrow in/out and hidden widths <= 128.
    assert d_in == 3, "forward(x, y, t) implies layers[0] == 3"
    assert d_in + 1 <= IN_PAD
    assert d_out <= OUT_PAD
    assert all(h <= HID_PAD for h in layers[1:-1]), "hidden width must be <= 128"

    # Narrow HBM input: [x, y, t, 1] in IN_PAD lanes.  Padded batch rows stay
    # all-zero (constant lane = 0 too), and are sliced off below.
    feats = jnp.concatenate(
        (x, y, t, jnp.ones_like(x)), axis=-1
    ).astype(jnp.float32)                                    # (n, 4)

    tm = max(8, min(tm_max, _round_up(n, 8)))
    n_pad = _round_up(n, tm)
    a_pad = jnp.zeros((n_pad, IN_PAD), jnp.float32).at[:n, : d_in + 1].set(feats)

    padded = _pad_params(params, layers)

    flat_params = [padded[0][0]]
    in_specs = [
        pl.BlockSpec((tm, IN_PAD), lambda i: (i, 0)),        # input tile
        pl.BlockSpec(padded[0][0].shape, lambda i: (0, 0)),  # w0 (bias folded)
    ]
    for wp, bp in padded[1:]:
        flat_params.extend([wp, bp])
        in_specs.append(pl.BlockSpec(wp.shape, lambda i: (0, 0)))
        in_specs.append(pl.BlockSpec(bp.shape, lambda i: (0, 0)))

    out_spec = pl.BlockSpec((tm, OUT_PAD), lambda i: (i, 0))

    out_pad_arr = pl.pallas_call(
        functools.partial(_mlp_kernel, n_layers),
        out_shape=jax.ShapeDtypeStruct((n_pad, OUT_PAD), jnp.float32),
        grid_spec=pltpu.PrefetchScalarGridSpec(
            num_scalar_prefetch=0,
            grid=(n_pad // tm,),
            in_specs=in_specs,
            out_specs=out_spec,
        ),
        compiler_params=pltpu.CompilerParams(
            dimension_semantics=("parallel",),
            # Double-buffered (tm, IN_PAD)/(tm, OUT_PAD) tiles + ~80 KiB of
            # weights + wide VMEM activations fit comfortably; set explicitly
            # so v5e's 16 MiB default scoped limit is never the binding factor.
            vmem_limit_bytes=32 * 1024 * 1024,
        ),
    )(a_pad, *flat_params)

    return out_pad_arr[:n, :d_out]                           # (N, layers[-1])


def pinn_forward_ref(x, y, t, params):
    """Plain-JAX reference of the PyTorch forward for verification."""
    a = jnp.concatenate((x, y, t), axis=-1).astype(jnp.float32)
    for i, (w, b) in enumerate(params):
        a = a @ w + b
        if i < len(params) - 1:
            a = jnp.tanh(a)
    return a


# TODO(synk): lossR/lossIC/lossBC/lossD use autograd.grad w.r.t. the inputs
# (PDE residual / BC losses); those are built with jax.grad/jax.jacfwd around
# this forward in plain JAX and are not part of the Pallas hot path here.

if __name__ == "__main__":
    layers = [3, 32, 32, 2]      # (x, y, t) -> hidden -> hidden -> (omega, psi)
    key = jax.random.PRNGKey(0)
    pkey, xkey, ykey, tkey = jax.random.split(key, 4)

    params = init_pinn_params(layers, pkey)

    n = 128
    x = jax.random.uniform(xkey, (n, 1), dtype=jnp.float32)
    y = jax.random.uniform(ykey, (n, 1), dtype=jnp.float32)
    t = jax.random.uniform(tkey, (n, 1), dtype=jnp.float32)

    out = pinn_forward(x, y, t, params, layers)
    out = jax.block_until_ready(out)

    ref = pinn_forward_ref(x, y, t, params)
    assert out.shape == (n, layers[-1])
    assert jnp.allclose(out, ref, atol=1e-5, rtol=1e-5)

    print("KERNEL_OK")
</pallas_src>

<mosaic_0001>
module attributes {stable_mosaic.version = 11 : i64} {
  func.func @_mlp_kernel(%arg0: i32, %arg1: memref<128x8xf32, #tpu.memory_space<vmem>>, %arg2: memref<8x128xf32, #tpu.memory_space<vmem>>, %arg3: memref<128x128xf32, #tpu.memory_space<vmem>>, %arg4: memref<1x128xf32, #tpu.memory_space<vmem>>, %arg5: memref<128x8xf32, #tpu.memory_space<vmem>>, %arg6: memref<1x8xf32, #tpu.memory_space<vmem>>, %arg7: memref<128x8xf32, #tpu.memory_space<vmem>>) attributes {dimension_semantics = [#tpu.dimension_semantics<parallel>], iteration_bounds = array<i64: 1>, scalar_prefetch = 0 : i64, scratch_operands = 0 : i64, tpu.core_type = #tpu.core_type<tc>, window_params = [{transform_indices = @transform_0, window_bounds = array<i64: 128, 8>}, {pipeline_mode = #tpu.pipeline_mode<synchronous>, transform_indices = @transform_1, window_bounds = array<i64: 8, 128>}, {pipeline_mode = #tpu.pipeline_mode<synchronous>, transform_indices = @transform_2, window_bounds = array<i64: 128, 128>}, {pipeline_mode = #tpu.pipeline_mode<synchronous>, transform_indices = @transform_3, window_bounds = array<i64: 1, 128>}, {pipeline_mode = #tpu.pipeline_mode<synchronous>, transform_indices = @transform_4, window_bounds = array<i64: 128, 8>}, {pipeline_mode = #tpu.pipeline_mode<synchronous>, transform_indices = @transform_5, window_bounds = array<i64: 1, 8>}, {transform_indices = @transform_6, window_bounds = array<i64: 128, 8>}]} {
    %c0 = arith.constant 0 : index
    %c0_0 = arith.constant 0 : index
    %0 = vector.load %arg1[%c0, %c0_0] : memref<128x8xf32, #tpu.memory_space<vmem>>, vector<128x8xf32>
    %c0_1 = arith.constant 0 : index
    %c0_2 = arith.constant 0 : index
    %1 = vector.load %arg2[%c0_1, %c0_2] : memref<8x128xf32, #tpu.memory_space<vmem>>, vector<8x128xf32>
    %cst = arith.constant dense<0.000000e+00> : vector<128x128xf32>
    %2 = tpu.matmul %0, %1, %cst {dimension_numbers = #tpu.dot_dimension_numbers<[1], [0], [0], [1], [0, 0, 1, 1], [], []>} : vector<128x8xf32>, vector<8x128xf32>, vector<128x128xf32> -> vector<128x128xf32>
    %3 = math.tanh %2 : vector<128x128xf32>
    %c0_3 = arith.constant 0 : index
    %c0_4 = arith.constant 0 : index
    %4 = vector.load %arg3[%c0_3, %c0_4] : memref<128x128xf32, #tpu.memory_space<vmem>>, vector<128x128xf32>
    %c0_5 = arith.constant 0 : index
    %c0_6 = arith.constant 0 : index
    %5 = vector.load %arg4[%c0_5, %c0_6] : memref<1x128xf32, #tpu.memory_space<vmem>>, vector<1x128xf32>
    %cst_7 = arith.constant dense<0.000000e+00> : vector<128x128xf32>
    %6 = tpu.matmul %3, %4, %cst_7 {dimension_numbers = #tpu.dot_dimension_numbers<[1], [0], [0], [1], [0, 0, 1, 1], [], []>} : vector<128x128xf32>, vector<128x128xf32>, vector<128x128xf32> -> vector<128x128xf32>
    %7 = vector.broadcast %5 : vector<1x128xf32> to vector<128x128xf32>
    %8 = arith.addf %6, %7 : vector<128x128xf32>
    %9 = math.tanh %8 : vector<128x128xf32>
    %c0_8 = arith.constant 0 : index
    %c0_9 = arith.constant 0 : index
    %10 = vector.load %arg5[%c0_8, %c0_9] : memref<128x8xf32, #tpu.memory_space<vmem>>, vector<128x8xf32>
    %c0_10 = arith.constant 0 : index
    %c0_11 = arith.constant 0 : index
    %11 = vector.load %arg6[%c0_10, %c0_11] : memref<1x8xf32, #tpu.memory_space<vmem>>, vector<1x8xf32>
    %cst_12 = arith.constant dense<0.000000e+00> : vector<128x8xf32>
    %12 = tpu.matmul %9, %10, %cst_12 {dimension_numbers = #tpu.dot_dimension_numbers<[1], [0], [0], [1], [0, 0, 1, 1], [], []>} : vector<128x128xf32>, vector<128x8xf32>, vector<128x8xf32> -> vector<128x8xf32>
    %13 = vector.broadcast %11 : vector<1x8xf32> to vector<128x8xf32>
    %14 = arith.addf %12, %13 : vector<128x8xf32>
    %c0_13 = arith.constant 0 : index
    %c0_14 = arith.constant 0 : index
    %15 = vector.load %arg7[%c0_13, %c0_14] : memref<128x8xf32, #tpu.memory_space<vmem>>, vector<128x8xf32>
    tpu.vector_store %arg7[%c0_13, %c0_14], %14 {strides = array<i32>} : memref<128x8xf32, #tpu.memory_space<vmem>>, vector<128x8xf32>,
    return
  }
  func.func @transform_0(%arg0: i32) -> (i32, i32) {
    %c0_i32 = arith.constant 0 : i32
    %c0_i32_0 = arith.constant 0 : i32
    return %arg0, %c0_i32 : i32, i32
  }
  func.func @transform_1(%arg0: i32) -> (i32, i32) {
    %c0_i32 = arith.constant 0 : i32
    %c0_i32_0 = arith.constant 0 : i32
    %c0_i32_1 = arith.constant 0 : i32
    return %c0_i32, %c0_i32_0 : i32, i32
  }
  func.func @transform_2(%arg0: i32) -> (i32, i32) {
    %c0_i32 = arith.constant 0 : i32
    %c0_i32_0 = arith.constant 0 : i32
    %c0_i32_1 = arith.constant 0 : i32
    return %c0_i32, %c0_i32_0 : i32, i32
  }
  func.func @transform_3(%arg0: i32) -> (i32, i32) {
    %c0_i32 = arith.constant 0 : i32
    %c0_i32_0 = arith.constant 0 : i32
    %c0_i32_1 = arith.constant 0 : i32
    return %c0_i32, %c0_i32_0 : i32, i32
  }
  func.func @transform_4(%arg0: i32) -> (i32, i32) {
    %c0_i32 = arith.constant 0 : i32
    %c0_i32_0 = arith.constant 0 : i32
    %c0_i32_1 = arith.constant 0 : i32
    return %c0_i32, %c0_i32_0 : i32, i32
  }
  func.func @transform_5(%arg0: i32) -> (i32, i32) {
    %c0_i32 = arith.constant 0 : i32
    %c0_i32_0 = arith.constant 0 : i32
    %c0_i32_1 = arith.constant 0 : i32
    return %c0_i32, %c0_i32_0 : i32, i32
  }
  func.func @transform_6(%arg0: i32) -> (i32, i32) {
    %c0_i32 = arith.constant 0 : i32
    %c0_i32_0 = arith.constant 0 : i32
    return %arg0, %c0_i32 : i32, i32
  }
}

</mosaic_0001>

<llo_original>
// kernel: tpu_custom_call.1
$region0: #{tpu_custom_call.1}
  #allocation0 [shape = 'u32[]', space=smem, size = 0x4, offset = 0x4, fixed_abs, tag = 'smem constant byte address 0x4 - core index']
  #allocation1 [shape = 'u32[72,128]{1,0:T(1,128)}', space=vmem, size = 0x9000, scoped, tag = 'internal scratch']
  %s0 = inlined_call_operand.vmem [shape: f32[128,8], index: 0, kind: input, shape index: {}]
  %s1 = inlined_call_operand.vmem [shape: f32[8,128], index: 1, kind: input, shape index: {}]
  %s2 = inlined_call_operand.vmem [shape: f32[128,128], index: 2, kind: input, shape index: {}]
  %s3 = inlined_call_operand.vmem [shape: f32[1,128], index: 3, kind: input, shape index: {}]
  %s4 = inlined_call_operand.vmem [shape: f32[128,8], index: 4, kind: input, shape index: {}]
  %s5 = inlined_call_operand.vmem [shape: f32[1,8], index: 5, kind: input, shape index: {}]
  %s6 = inlined_call_operand.vmem [shape: f32[128,8], index: 6, kind: output, shape index: {}]
  %s7 = sld [smem:[#allocation0]]
  $region34: #{tpu_custom_call.1} parent=0
    _
  %s9 = ssub.s32 1, %s7
  %s10 = scalar_select 0, %s9, %s7
  // Predicated region
  $region2: #{tpu_custom_call.1} parent=0 // pred_check
    _
  $region3: #{tpu_custom_call.1} parent=0 // pred_check_branch
    %12 = sbr.rel (0) target = $region5
  $region4: #{tpu_custom_call.1} parent=0 // pred_region
    _
  $region5: #{tpu_custom_call.1} parent=0 // pred_fallthru
    _
  // Predicated region
  $region6: #{tpu_custom_call.1} parent=0 // pred_check
    _
  $region7: #{tpu_custom_call.1} parent=0 // pred_check_branch
    %14 = sbr.rel (0) target = $region9
  $region8: #{tpu_custom_call.1} parent=0 // pred_region
    _
  $region9: #{tpu_custom_call.1} parent=0 // pred_fallthru
    _
  // Predicated region
  $region10: #{tpu_custom_call.1} parent=0 // pred_check
    _
  $region11: #{tpu_custom_call.1} parent=0 // pred_check_branch
    %16 = sbr.rel (0) target = $region13
  $region12: #{tpu_custom_call.1} parent=0 // pred_region
    _
  $region13: #{tpu_custom_call.1} parent=0 // pred_fallthru
    _
  // Predicated region
  $region14: #{tpu_custom_call.1} parent=0 // pred_check
    _
  $region15: #{tpu_custom_call.1} parent=0 // pred_check_branch
    %18 = sbr.rel (0) target = $region17
  $region16: #{tpu_custom_call.1} parent=0 // pred_region
    _
  $region17: #{tpu_custom_call.1} parent=0 // pred_fallthru
    _
  // Predicated region
  $region18: #{tpu_custom_call.1} parent=0 // pred_check
    _
  $region19: #{tpu_custom_call.1} parent=0 // pred_check_branch
    %20 = sbr.rel (0) target = $region21
  $region20: #{tpu_custom_call.1} parent=0 // pred_region
    _
  $region21: #{tpu_custom_call.1} parent=0 // pred_fallthru
    _
  // Predicated region
  $region22: #{tpu_custom_call.1} parent=0 // pred_check
    _
  $region23: #{tpu_custom_call.1} parent=0 // pred_check_branch
    %22 = sbr.rel (0) target = $region25
  $region24: #{tpu_custom_call.1} parent=0 // pred_region
    _
  $region25: #{tpu_custom_call.1} parent=0 // pred_fallthru
    _
  %v23 = vld [vmem:[%s0] sm:$0xff]
  %v24 = vld [vmem:[%s0 + $0x8] sm:$0xff]
  %v25 = vld [vmem:[%s0 + $0x10] sm:$0xff]
  %v26 = vld [vmem:[%s0 + $0x18] sm:$0xff]
  %v27 = vld [vmem:[%s0 + $0x20] sm:$0xff]
  %v28 = vld [vmem:[%s0 + $0x28] sm:$0xff]
  %v29 = vld [vmem:[%s0 + $0x30] sm:$0xff]
  %v30 = vld [vmem:[%s0 + $0x38] sm:$0xff]
  %v31 = vld [vmem:[%s0 + $0x40] sm:$0xff]
  %v32 = vld [vmem:[%s0 + $0x48] sm:$0xff]
  %v33 = vld [vmem:[%s0 + $0x50] sm:$0xff]
  %v34 = vld [vmem:[%s0 + $0x58] sm:$0xff]
  %v35 = vld [vmem:[%s0 + $0x60] sm:$0xff]
  %v36 = vld [vmem:[%s0 + $0x68] sm:$0xff]
  %v37 = vld [vmem:[%s0 + $0x70] sm:$0xff]
  %v38 = vld [vmem:[%s0 + $0x78] sm:$0xff]
  %v39 = vld [vmem:[%s1] sm:$0xff]
  %vm40 = vcmask 64512
  %v42 = vsel %vm40, %v23, 0
  %v45 = vsel %vm40, %v24, 0
  %v48 = vsel %vm40, %v25, 0
  %v51 = vsel %vm40, %v26, 0
  %v54 = vsel %vm40, %v27, 0
  %v57 = vsel %vm40, %v28, 0
  %v60 = vsel %vm40, %v29, 0
  %v63 = vsel %vm40, %v30, 0
  %v66 = vsel %vm40, %v31, 0
  %v69 = vsel %vm40, %v32, 0
  %v72 = vsel %vm40, %v33, 0
  %v75 = vsel %vm40, %v34, 0
  %v78 = vsel %vm40, %v35, 0
  %v81 = vsel %vm40, %v36, 0
  %v84 = vsel %vm40, %v37, 0
  %v87 = vsel %vm40, %v38, 0
  %89 = vmatpush.msra.mxu0 0.0
  %90 = vmatpush.msra.mxu0 0.0
  %91 = vmatpush.msra.mxu0 0.0
  %92 = vmatpush.msra.mxu0 0.0
  %93 = vmatpush.msra.mxu0 0.0
  %94 = vmatpush.msra.mxu0 0.0
  %95 = vmatpush.msra.mxu0 0.0
  %96 = vmatpush.msra.mxu0 0.0
  %97 = vmatpush.msra.mxu0 0.0
  %98 = vmatpush.msra.mxu0 0.0
  %99 = vmatpush.msra.mxu0 0.0
  %100 = vmatpush.msra.mxu0 0.0
  %101 = vmatpush.msra.mxu0 0.0
  %102 = vmatpush.msra.mxu0 0.0
  %103 = vmatpush.msra.mxu0 0.0
  %104 = vmatpush.msra.mxu0 %v39
  %105 = vmatmul.f32.gmra.mxu0 %v42
  %v106 = vpop.f32.mrf.mxu0
  %v107 = vadd.f32 0.0, %v106
  %108 = vmatmul.f32.gmra.mxu0 %v45
  %v109 = vpop.f32.mrf.mxu0
  %v110 = vadd.f32 0.0, %v109
  %111 = vmatmul.f32.gmra.mxu0 %v48
  %v112 = vpop.f32.mrf.mxu0
  %v113 = vadd.f32 0.0, %v112
  %114 = vmatmul.f32.gmra.mxu0 %v51
  %v115 = vpop.f32.mrf.mxu0
  %v116 = vadd.f32 0.0, %v115
  %117 = vmatmul.f32.gmra.mxu0 %v54
  %v118 = vpop.f32.mrf.mxu0
  %v119 = vadd.f32 0.0, %v118
  %120 = vmatmul.f32.gmra.mxu0 %v57
  %v121 = vpop.f32.mrf.mxu0
  %v122 = vadd.f32 0.0, %v121
  %123 = vmatmul.f32.gmra.mxu0 %v60
  %v124 = vpop.f32.mrf.mxu0
  %v125 = vadd.f32 0.0, %v124
  %126 = vmatmul.f32.gmra.mxu0 %v63
  %v127 = vpop.f32.mrf.mxu0
  %v128 = vadd.f32 0.0, %v127
  %129 = vmatmul.f32.gmra.mxu0 %v66
  %v130 = vpop.f32.mrf.mxu0
  %v131 = vadd.f32 0.0, %v130
  %132 = vmatmul.f32.gmra.mxu0 %v69
  %v133 = vpop.f32.mrf.mxu0
  %v134 = vadd.f32 0.0, %v133
  %135 = vmatmul.f32.gmra.mxu0 %v72
  %v136 = vpop.f32.mrf.mxu0
  %v137 = vadd.f32 0.0, %v136
  %138 = vmatmul.f32.gmra.mxu0 %v75
  %v139 = vpop.f32.mrf.mxu0
  %v140 = vadd.f32 0.0, %v139
  %141 = vmatmul.f32.gmra.mxu0 %v78
  %v142 = vpop.f32.mrf.mxu0
  %v143 = vadd.f32 0.0, %v142
  %144 = vmatmul.f32.gmra.mxu0 %v81
  %v145 = vpop.f32.mrf.mxu0
  %v146 = vadd.f32 0.0, %v145
  %147 = vmatmul.f32.gmra.mxu0 %v84
  %v148 = vpop.f32.mrf.mxu0
  %v149 = vadd.f32 0.0, %v148
  %150 = vmatmul.f32.gmra.mxu0 %v87
  %v151 = vpop.f32.mrf.mxu0
  %v152 = vadd.f32 0.0, %v151
  %153 = vdwg.mxu0
  %v154 = vtanh.pop %v107
  %v155 = vtanh.pop %v110
  %v156 = vtanh.pop %v113
  %v157 = vtanh.pop %v116
  %v158 = vtanh.pop %v119
  %v159 = vtanh.pop %v122
  %v160 = vtanh.pop %v125
  %v161 = vtanh.pop %v128
  %v162 = vtanh.pop %v131
  %v163 = vtanh.pop %v134
  %v164 = vtanh.pop %v137
  %v165 = vtanh.pop %v140
  %v166 = vtanh.pop %v143
  %v167 = vtanh.pop %v146
  %v168 = vtanh.pop %v149
  %v169 = vtanh.pop %v152
  %v170 = vld [vmem:[%s2] sm:$0xff]
  %v171 = vld [vmem:[%s2 + $0x8] sm:$0xff]
  %v172 = vld [vmem:[%s2 + $0x10] sm:$0xff]
  %v173 = vld [vmem:[%s2 + $0x18] sm:$0xff]
  %v174 = vld [vmem:[%s2 + $0x20] sm:$0xff]
  %v175 = vld [vmem:[%s2 + $0x28] sm:$0xff]
  %v176 = vld [vmem:[%s2 + $0x30] sm:$0xff]
  %v177 = vld [vmem:[%s2 + $0x38] sm:$0xff]
  %v178 = vld [vmem:[%s2 + $0x40] sm:$0xff]
  %v179 = vld [vmem:[%s2 + $0x48] sm:$0xff]
  %v180 = vld [vmem:[%s2 + $0x50] sm:$0xff]
  %v181 = vld [vmem:[%s2 + $0x58] sm:$0xff]
  %v182 = vld [vmem:[%s2 + $0x60] sm:$0xff]
  %v183 = vld [vmem:[%s2 + $0x68] sm:$0xff]
  %v184 = vld [vmem:[%s2 + $0x70] sm:$0xff]
  %v185 = vld [vmem:[%s2 + $0x78] sm:$0xff]
  %v186 = vld [vmem:[%s3] sm:$0x1]
  %v188 = vperm.slane %v186, 0
  %190 = vmatpush.msra.mxu0 %v185
  %191 = vmatpush.msra.mxu0 %v184
  %192 = vmatpush.msra.mxu0 %v183
  %193 = vmatpush.msra.mxu0 %v182
  %194 = vmatpush.msra.mxu0 %v181
  %195 = vmatpush.msra.mxu0 %v180
  %196 = vmatpush.msra.mxu0 %v179
  %197 = vmatpush.msra.mxu0 %v178
  %198 = vmatpush.msra.mxu0 %v177
  %199 = vmatpush.msra.mxu0 %v176
  %200 = vmatpush.msra.mxu0 %v175
  %201 = vmatpush.msra.mxu0 %v174
  %202 = vmatpush.msra.mxu0 %v173
  %203 = vmatpush.msra.mxu0 %v172
  %204 = vmatpush.msra.mxu0 %v171
  %205 = vmatpush.msra.mxu0 %v170
  %206 = vmatmul.f32.gmra.mxu0 %v154
  %v207 = vpop.f32.mrf.mxu0
  %v208 = vadd.f32 %v188, %v207
  %209 = vmatmul.f32.gmra.mxu0 %v155
  %v210 = vpop.f32.mrf.mxu0
  %v211 = vadd.f32 %v188, %v210
  %212 = vmatmul.f32.gmra.mxu0 %v156
  %v213 = vpop.f32.mrf.mxu0
  %v214 = vadd.f32 %v188, %v213
  %215 = vmatmul.f32.gmra.mxu0 %v157
  %v216 = vpop.f32.mrf.mxu0
  %v217 = vadd.f32 %v188, %v216
  %218 = vmatmul.f32.gmra.mxu0 %v158
  %v219 = vpop.f32.mrf.mxu0
  %v220 = vadd.f32 %v188, %v219
  %221 = vmatmul.f32.gmra.mxu0 %v159
  %v222 = vpop.f32.mrf.mxu0
  %v223 = vadd.f32 %v188, %v222
  %224 = vmatmul.f32.gmra.mxu0 %v160
  %v225 = vpop.f32.mrf.mxu0
  %v226 = vadd.f32 %v188, %v225
  %227 = vmatmul.f32.gmra.mxu0 %v161
  %v228 = vpop.f32.mrf.mxu0
  %v229 = vadd.f32 %v188, %v228
  %230 = vmatmul.f32.gmra.mxu0 %v162
  %v231 = vpop.f32.mrf.mxu0
  %v232 = vadd.f32 %v188, %v231
  %233 = vmatmul.f32.gmra.mxu0 %v163
  %v234 = vpop.f32.mrf.mxu0
  %v235 = vadd.f32 %v188, %v234
  %236 = vmatmul.f32.gmra.mxu0 %v164
  %v237 = vpop.f32.mrf.mxu0
  %v238 = vadd.f32 %v188, %v237
  %239 = vmatmul.f32.gmra.mxu0 %v165
  %v240 = vpop.f32.mrf.mxu0
  %v241 = vadd.f32 %v188, %v240
  %242 = vmatmul.f32.gmra.mxu0 %v166
  %v243 = vpop.f32.mrf.mxu0
  %v244 = vadd.f32 %v188, %v243
  %245 = vmatmul.f32.gmra.mxu0 %v167
  %v246 = vpop.f32.mrf.mxu0
  %v247 = vadd.f32 %v188, %v246
  %248 = vmatmul.f32.gmra.mxu0 %v168
  %v249 = vpop.f32.mrf.mxu0
  %v250 = vadd.f32 %v188, %v249
  %251 = vmatmul.f32.gmra.mxu0 %v169
  %v252 = vpop.f32.mrf.mxu0
  %v253 = vadd.f32 %v188, %v252
  %254 = vdwg.mxu0
  %v255 = vtanh.pop %v208
  %v256 = vtanh.pop %v211
  %v257 = vtanh.pop %v214
  %v258 = vtanh.pop %v217
  %v259 = vtanh.pop %v220
  %v260 = vtanh.pop %v223
  %v261 = vtanh.pop %v226
  %v262 = vtanh.pop %v229
  %v263 = vtanh.pop %v232
  %v264 = vtanh.pop %v235
  %v265 = vtanh.pop %v238
  %v266 = vtanh.pop %v241
  %v267 = vtanh.pop %v244
  %v268 = vtanh.pop %v247
  %v269 = vtanh.pop %v250
  %v270 = vtanh.pop %v253
  %v271 = vld [vmem:[%s4] sm:$0xff]
  %v272 = vld [vmem:[%s4 + $0x8] sm:$0xff]
  %v273 = vld [vmem:[%s4 + $0x10] sm:$0xff]
  %v274 = vld [vmem:[%s4 + $0x18] sm:$0xff]
  %v275 = vld [vmem:[%s4 + $0x20] sm:$0xff]
  %v276 = vld [vmem:[%s4 + $0x28] sm:$0xff]
  %v277 = vld [vmem:[%s4 + $0x30] sm:$0xff]
  %v278 = vld [vmem:[%s4 + $0x38] sm:$0xff]
  %v279 = vld [vmem:[%s4 + $0x40] sm:$0xff]
  %v280 = vld [vmem:[%s4 + $0x48] sm:$0xff]
  %v281 = vld [vmem:[%s4 + $0x50] sm:$0xff]
  %v282 = vld [vmem:[%s4 + $0x58] sm:$0xff]
  %v283 = vld [vmem:[%s4 + $0x60] sm:$0xff]
  %v284 = vld [vmem:[%s4 + $0x68] sm:$0xff]
  %v285 = vld [vmem:[%s4 + $0x70] sm:$0xff]
  %v286 = vld [vmem:[%s4 + $0x78] sm:$0xff]
  %v287 = vld [vmem:[%s5] sm:$0x1]
  %v289 = vperm.slane %v287, 0
  %291 = vmatpush.msra.mxu0 %v286
  %292 = vmatpush.msra.mxu0 %v285
  %293 = vmatpush.msra.mxu0 %v284
  %294 = vmatpush.msra.mxu0 %v283
  %295 = vmatpush.msra.mxu0 %v282
  %296 = vmatpush.msra.mxu0 %v281
  %297 = vmatpush.msra.mxu0 %v280
  %298 = vmatpush.msra.mxu0 %v279
  %299 = vmatpush.msra.mxu0 %v278
  %300 = vmatpush.msra.mxu0 %v277
  %301 = vmatpush.msra.mxu0 %v276
  %302 = vmatpush.msra.mxu0 %v275
  %303 = vmatpush.msra.mxu0 %v274
  %304 = vmatpush.msra.mxu0 %v273
  %305 = vmatpush.msra.mxu0 %v272
  %306 = vmatpush.msra.mxu0 %v271
  %307 = vmatmul.f32.gmra.mxu0 %v255
  %v308 = vpop.f32.mrf.mxu0
  %v309 = vadd.f32 %v289, %v308
  %310 = vmatmul.f32.gmra.mxu0 %v256
  %v311 = vpop.f32.mrf.mxu0
  %v312 = vadd.f32 %v289, %v311
  %313 = vmatmul.f32.gmra.mxu0 %v257
  %v314 = vpop.f32.mrf.mxu0
  %v315 = vadd.f32 %v289, %v314
  %316 = vmatmul.f32.gmra.mxu0 %v258
  %v317 = vpop.f32.mrf.mxu0
  %v318 = vadd.f32 %v289, %v317
  %319 = vmatmul.f32.gmra.mxu0 %v259
  %v320 = vpop.f32.mrf.mxu0
  %v321 = vadd.f32 %v289, %v320
  %322 = vmatmul.f32.gmra.mxu0 %v260
  %v323 = vpop.f32.mrf.mxu0
  %v324 = vadd.f32 %v289, %v323
  %325 = vmatmul.f32.gmra.mxu0 %v261
  %v326 = vpop.f32.mrf.mxu0
  %v327 = vadd.f32 %v289, %v326
  %328 = vmatmul.f32.gmra.mxu0 %v262
  %v329 = vpop.f32.mrf.mxu0
  %v330 = vadd.f32 %v289, %v329
  %331 = vmatmul.f32.gmra.mxu0 %v263
  %v332 = vpop.f32.mrf.mxu0
  %v333 = vadd.f32 %v289, %v332
  %334 = vmatmul.f32.gmra.mxu0 %v264
  %v335 = vpop.f32.mrf.mxu0
  %v336 = vadd.f32 %v289, %v335
  %337 = vmatmul.f32.gmra.mxu0 %v265
  %v338 = vpop.f32.mrf.mxu0
  %v339 = vadd.f32 %v289, %v338
  %340 = vmatmul.f32.gmra.mxu0 %v266
  %v341 = vpop.f32.mrf.mxu0
  %v342 = vadd.f32 %v289, %v341
  %343 = vmatmul.f32.gmra.mxu0 %v267
  %v344 = vpop.f32.mrf.mxu0
  %v345 = vadd.f32 %v289, %v344
  %346 = vmatmul.f32.gmra.mxu0 %v268
  %v347 = vpop.f32.mrf.mxu0
  %v348 = vadd.f32 %v289, %v347
  %349 = vmatmul.f32.gmra.mxu0 %v269
  %v350 = vpop.f32.mrf.mxu0
  %v351 = vadd.f32 %v289, %v350
  %352 = vmatmul.f32.gmra.mxu0 %v270
  %v353 = vpop.f32.mrf.mxu0
  %v354 = vadd.f32 %v289, %v353
  %355 = vdwg.mxu0
  %356 = vst.msk [vmem:[%s6] sm:$0xff] %vm40, %v309
  %357 = vst.msk [vmem:[%s6 + $0x8] sm:$0xff] %vm40, %v312
  %358 = vst.msk [vmem:[%s6 + $0x10] sm:$0xff] %vm40, %v315
  %359 = vst.msk [vmem:[%s6 + $0x18] sm:$0xff] %vm40, %v318
  %360 = vst.msk [vmem:[%s6 + $0x20] sm:$0xff] %vm40, %v321
  %361 = vst.msk [vmem:[%s6 + $0x28] sm:$0xff] %vm40, %v324
  %362 = vst.msk [vmem:[%s6 + $0x30] sm:$0xff] %vm40, %v327
  %363 = vst.msk [vmem:[%s6 + $0x38] sm:$0xff] %vm40, %v330
  %364 = vst.msk [vmem:[%s6 + $0x40] sm:$0xff] %vm40, %v333
  %365 = vst.msk [vmem:[%s6 + $0x48] sm:$0xff] %vm40, %v336
  %366 = vst.msk [vmem:[%s6 + $0x50] sm:$0xff] %vm40, %v339
  %367 = vst.msk [vmem:[%s6 + $0x58] sm:$0xff] %vm40, %v342
  %368 = vst.msk [vmem:[%s6 + $0x60] sm:$0xff] %vm40, %v345
  %369 = vst.msk [vmem:[%s6 + $0x68] sm:$0xff] %vm40, %v348
  %370 = vst.msk [vmem:[%s6 + $0x70] sm:$0xff] %vm40, %v351
  %371 = vst.msk [vmem:[%s6 + $0x78] sm:$0xff] %vm40, %v354
  // Predicated region
  $region26: #{tpu_custom_call.1} parent=0 // pred_check
    _
  $region27: #{tpu_custom_call.1} parent=0 // pred_check_branch
    %373 = sbr.rel (0) target = $region29
  $region28: #{tpu_custom_call.1} parent=0 // pred_region
    _
  $region29: #{tpu_custom_call.1} parent=0 // pred_fallthru
    _
  // Predicated region
  $region30: #{tpu_custom_call.1} parent=0 // pred_check
    _
  $region31: #{tpu_custom_call.1} parent=0 // pred_check_branch
    %375 = sbr.rel (0) target = $region33
  $region32: #{tpu_custom_call.1} parent=0 // pred_region
    _
  $region33: #{tpu_custom_call.1} parent=0 // pred_fallthru
    _

</llo_original>
